<compile_context>
chip_gen: v5e
topology: v5e:2x2
jax: 0.10.0
libtpu: 0.0.40
codegen_flags: <defaults>
</compile_context>

<pallas_src>
import math
import functools

import jax
import jax.numpy as jnp
from jax.experimental import pallas as pl
from jax.experimental.pallas import tpu as pltpu


def _round_up(x, m):
    return (x + m - 1) // m * m


def _flexnet_kernel(x_ref, w1_ref, b1_ref, w2_ref, b2_ref, w3_ref, b3_ref, o_ref):
    """One batch tile: softmax(relu(relu(x@W1+b1)@W2+b2)@W3+b3).

    x arrives f32 and is cast to bf16 in-kernel; matmuls accumulate in f32;
    bias/ReLU/exp/softmax tail stays f32. Softmax runs over the 8 real
    output columns only.
    """
    x = x_ref[...].astype(w1_ref.dtype)

    # Layer 1: Linear(in, hid) + ReLU
    h = jnp.dot(x, w1_ref[...], preferred_element_type=jnp.float32)
    h = jnp.maximum(h + b1_ref[...], 0.0)

    # Layer 2: Linear(hid, hid) + ReLU
    h = jnp.dot(h.astype(w2_ref.dtype), w2_ref[...],
                preferred_element_type=jnp.float32)
    h = jnp.maximum(h + b2_ref[...], 0.0)

    # Output head: Linear(hid, out)
    logits = jnp.dot(h.astype(w3_ref.dtype), w3_ref[...],
                     preferred_element_type=jnp.float32)
    logits = logits + b3_ref[...]

    # Numerically stable softmax over dim=1 (8 real columns).
    m = jnp.max(logits, axis=1, keepdims=True)
    e = jnp.exp(logits - m)
    denom = jnp.sum(e, axis=1, keepdims=True)
    # Exact divide (not approx reciprocal) so rows sum to 1 within f32 ulps.
    o_ref[...] = (e / denom).astype(o_ref.dtype)


def prepare_params(params):
    """One-time parameter prep: transpose PyTorch-layout weights [out, in] ->
    [in, out] and cast matmul operands to bf16; biases stay f32."""
    w1 = jnp.asarray(params["w1"], jnp.float32).T.astype(jnp.bfloat16)   # [in, hid]
    w2 = jnp.asarray(params["w2"], jnp.float32).T.astype(jnp.bfloat16)   # [hid, hid]
    w3 = jnp.asarray(params["w3"], jnp.float32).T.astype(jnp.bfloat16)   # [hid, out]
    b1 = jnp.asarray(params["b1"], jnp.float32)[None, :]
    b2 = jnp.asarray(params["b2"], jnp.float32)[None, :]
    b3 = jnp.asarray(params["b3"], jnp.float32)[None, :]
    return {"w1": w1, "b1": b1, "w2": w2, "b2": b2, "w3": w3, "b3": b3}


@functools.partial(jax.jit, static_argnames=("tb",))
def flexnet_forward(x, prepped, *, tb=2048):
    """x: [B, input_size] f32. prepped: output of prepare_params()."""
    B, in_dim = x.shape
    hid = prepped["w1"].shape[1]
    out_dim = prepped["w3"].shape[1]

    # Batch tiling: big tiles amortize per-step overhead; pad only when the
    # tile does not divide the (8-rounded) batch.
    Bp = _round_up(B, 8)
    TB = min(tb, Bp)
    Bp = _round_up(Bp, TB)
    if Bp != B:
        x = jnp.pad(x, ((0, Bp - B), (0, 0)))

    grid = (Bp // TB,)

    def resident(shape):
        # Same block index every step -> block stays VMEM-resident (no re-DMA).
        return pl.BlockSpec(shape, lambda i: (0, 0))

    w_bytes = sum(int(prepped[k].size) * int(prepped[k].dtype.itemsize)
                  for k in prepped)
    cost = pl.CostEstimate(
        flops=2 * Bp * (in_dim * hid + hid * hid + hid * out_dim),
        transcendentals=Bp * (out_dim + 1),               # exp + divide
        bytes_accessed=Bp * in_dim * 4 + Bp * out_dim * 4 + w_bytes,
    )

    out = pl.pallas_call(
        _flexnet_kernel,
        out_shape=jax.ShapeDtypeStruct((Bp, out_dim), jnp.float32),
        grid=grid,
        in_specs=[
            pl.BlockSpec((TB, in_dim), lambda i: (i, 0)),     # streamed batch tile
            resident((in_dim, hid)), resident((1, hid)),      # W1, b1
            resident((hid, hid)),    resident((1, hid)),      # W2, b2
            resident((hid, out_dim)), resident((1, out_dim)),  # W3, b3
        ],
        out_specs=pl.BlockSpec((TB, out_dim), lambda i: (i, 0)),  # dense 8-wide store
        compiler_params=pltpu.CompilerParams(
            # TODO(synk): on v7x, try pltpu.CORE_PARALLEL / core_map to confirm
            # both TensorCores are active on the batch axis.
            dimension_semantics=("parallel",),
        ),
        cost_estimate=cost,
    )(x, prepped["w1"], prepped["b1"], prepped["w2"], prepped["b2"],
      prepped["w3"], prepped["b3"])

    if Bp != B:
        out = out[:B]
    return out


def _init_linear(key, in_features, out_features):
    """Deterministic PyTorch-style init: U(-1/sqrt(fan_in), 1/sqrt(fan_in))."""
    k_w, k_b = jax.random.split(key)
    bound = 1.0 / math.sqrt(in_features)
    w = jax.random.uniform(k_w, (out_features, in_features), jnp.float32, -bound, bound)
    b = jax.random.uniform(k_b, (out_features,), jnp.float32, -bound, bound)
    return w, b


def _reference_forward(x, params):
    """Pure-JAX reference mirroring the PyTorch module, using the same bf16
    matmul-operand casting as the kernel (f32 accumulation / f32 softmax)."""
    bf = jnp.bfloat16
    h = jnp.dot(x.astype(bf), params["w1"].T.astype(bf),
                preferred_element_type=jnp.float32) + params["b1"]
    h = jnp.maximum(h, 0.0)
    h = jnp.dot(h.astype(bf), params["w2"].T.astype(bf),
                preferred_element_type=jnp.float32) + params["b2"]
    h = jnp.maximum(h, 0.0)
    logits = jnp.dot(h.astype(bf), params["w3"].T.astype(bf),
                     preferred_element_type=jnp.float32) + params["b3"]
    return jax.nn.softmax(logits, axis=1)


if __name__ == "__main__":
    input_size, hidden_dim, output_size = 16, 32, 8

    key = jax.random.PRNGKey(0)
    k_x1, k_x2, k1, k2, k3 = jax.random.split(key, 5)

    w1, b1 = _init_linear(k1, input_size, hidden_dim)    # linear_1
    w2, b2 = _init_linear(k2, hidden_dim, hidden_dim)    # linear_2 (hidden)
    w3, b3 = _init_linear(k3, hidden_dim, output_size)   # linear_4 (softmax head)
    params = {"w1": w1, "b1": b1, "w2": w2, "b2": b2, "w3": w3, "b3": b3}

    prepped = prepare_params(params)                     # one-time prep

    # Case 1: batch tiled over a 3-step grid (TB=128, exercises pipelining).
    x1 = jax.random.normal(k_x1, (384, input_size), jnp.float32)
    out1 = jax.block_until_ready(flexnet_forward(x1, prepped, tb=128))
    ref1 = _reference_forward(x1, params)
    assert out1.shape == (384, output_size)
    assert jnp.allclose(out1, ref1, atol=2e-3, rtol=2e-3), "mismatch vs reference (case 1)"
    assert jnp.allclose(jnp.sum(out1, axis=1), jnp.ones((384,)), atol=1e-3)

    # Case 2: tiny batch (single grid step), matching the module's toy sizes.
    x2 = jax.random.normal(k_x2, (8, input_size), jnp.float32)
    out2 = jax.block_until_ready(flexnet_forward(x2, prepped))
    ref2 = _reference_forward(x2, params)
    assert out2.shape == (8, output_size)
    assert jnp.allclose(out2, ref2, atol=2e-3, rtol=2e-3), "mismatch vs reference (case 2)"
    assert jnp.allclose(jnp.sum(out2, axis=1), jnp.ones((8,)), atol=1e-3)

    print("KERNEL_OK")
</pallas_src>

<mosaic_0001>
module attributes {stable_mosaic.version = 11 : i64} {
  func.func @_flexnet_kernel(%arg0: i32, %arg1: memref<128x16xf32, #tpu.memory_space<vmem>>, %arg2: memref<16x32xbf16, #tpu.memory_space<vmem>>, %arg3: memref<1x32xf32, #tpu.memory_space<vmem>>, %arg4: memref<32x32xbf16, #tpu.memory_space<vmem>>, %arg5: memref<1x32xf32, #tpu.memory_space<vmem>>, %arg6: memref<32x8xbf16, #tpu.memory_space<vmem>>, %arg7: memref<1x8xf32, #tpu.memory_space<vmem>>, %arg8: memref<128x8xf32, #tpu.memory_space<vmem>>) attributes {dimension_semantics = [#tpu.dimension_semantics<parallel>], iteration_bounds = array<i64: 3>, scalar_prefetch = 0 : i64, scratch_operands = 0 : i64, tpu.core_type = #tpu.core_type<tc>, window_params = [{transform_indices = @transform_0, window_bounds = array<i64: 128, 16>}, {pipeline_mode = #tpu.pipeline_mode<synchronous>, transform_indices = @transform_1, window_bounds = array<i64: 16, 32>}, {pipeline_mode = #tpu.pipeline_mode<synchronous>, transform_indices = @transform_2, window_bounds = array<i64: 1, 32>}, {pipeline_mode = #tpu.pipeline_mode<synchronous>, transform_indices = @transform_3, window_bounds = array<i64: 32, 32>}, {pipeline_mode = #tpu.pipeline_mode<synchronous>, transform_indices = @transform_4, window_bounds = array<i64: 1, 32>}, {pipeline_mode = #tpu.pipeline_mode<synchronous>, transform_indices = @transform_5, window_bounds = array<i64: 32, 8>}, {pipeline_mode = #tpu.pipeline_mode<synchronous>, transform_indices = @transform_6, window_bounds = array<i64: 1, 8>}, {transform_indices = @transform_7, window_bounds = array<i64: 128, 8>}]} {
    %c0 = arith.constant 0 : index
    %c0_0 = arith.constant 0 : index
    %0 = vector.load %arg1[%c0, %c0_0] : memref<128x16xf32, #tpu.memory_space<vmem>>, vector<128x16xf32>
    %1 = arith.truncf %0 : vector<128x16xf32> to vector<128x16xbf16>
    %c0_1 = arith.constant 0 : index
    %c0_2 = arith.constant 0 : index
    %2 = vector.load %arg2[%c0_1, %c0_2] : memref<16x32xbf16, #tpu.memory_space<vmem>>, vector<16x32xbf16>
    %cst = arith.constant dense<0.000000e+00> : vector<128x32xf32>
    %3 = tpu.matmul %1, %2, %cst {dimension_numbers = #tpu.dot_dimension_numbers<[1], [0], [0], [1], [0, 0, 1, 1], [], []>} : vector<128x16xbf16>, vector<16x32xbf16>, vector<128x32xf32> -> vector<128x32xf32>
    %c0_3 = arith.constant 0 : index
    %c0_4 = arith.constant 0 : index
    %4 = vector.load %arg3[%c0_3, %c0_4] : memref<1x32xf32, #tpu.memory_space<vmem>>, vector<1x32xf32>
    %5 = vector.broadcast %4 : vector<1x32xf32> to vector<128x32xf32>
    %6 = arith.addf %3, %5 : vector<128x32xf32>
    %cst_5 = arith.constant 0.000000e+00 : f32
    %7 = vector.broadcast %cst_5 : f32 to vector<128x32xf32>
    %8 = arith.maximumf %6, %7 : vector<128x32xf32>
    %9 = arith.truncf %8 : vector<128x32xf32> to vector<128x32xbf16>
    %c0_6 = arith.constant 0 : index
    %c0_7 = arith.constant 0 : index
    %10 = vector.load %arg4[%c0_6, %c0_7] : memref<32x32xbf16, #tpu.memory_space<vmem>>, vector<32x32xbf16>
    %cst_8 = arith.constant dense<0.000000e+00> : vector<128x32xf32>
    %11 = tpu.matmul %9, %10, %cst_8 {dimension_numbers = #tpu.dot_dimension_numbers<[1], [0], [0], [1], [0, 0, 1, 1], [], []>} : vector<128x32xbf16>, vector<32x32xbf16>, vector<128x32xf32> -> vector<128x32xf32>
    %c0_9 = arith.constant 0 : index
    %c0_10 = arith.constant 0 : index
    %12 = vector.load %arg5[%c0_9, %c0_10] : memref<1x32xf32, #tpu.memory_space<vmem>>, vector<1x32xf32>
    %13 = vector.broadcast %12 : vector<1x32xf32> to vector<128x32xf32>
    %14 = arith.addf %11, %13 : vector<128x32xf32>
    %cst_11 = arith.constant 0.000000e+00 : f32
    %15 = vector.broadcast %cst_11 : f32 to vector<128x32xf32>
    %16 = arith.maximumf %14, %15 : vector<128x32xf32>
    %17 = arith.truncf %16 : vector<128x32xf32> to vector<128x32xbf16>
    %c0_12 = arith.constant 0 : index
    %c0_13 = arith.constant 0 : index
    %18 = vector.load %arg6[%c0_12, %c0_13] : memref<32x8xbf16, #tpu.memory_space<vmem>>, vector<32x8xbf16>
    %cst_14 = arith.constant dense<0.000000e+00> : vector<128x8xf32>
    %19 = tpu.matmul %17, %18, %cst_14 {dimension_numbers = #tpu.dot_dimension_numbers<[1], [0], [0], [1], [0, 0, 1, 1], [], []>} : vector<128x32xbf16>, vector<32x8xbf16>, vector<128x8xf32> -> vector<128x8xf32>
    %c0_15 = arith.constant 0 : index
    %c0_16 = arith.constant 0 : index
    %20 = vector.load %arg7[%c0_15, %c0_16] : memref<1x8xf32, #tpu.memory_space<vmem>>, vector<1x8xf32>
    %21 = vector.broadcast %20 : vector<1x8xf32> to vector<128x8xf32>
    %22 = arith.addf %19, %21 : vector<128x8xf32>
    %cst_17 = arith.constant dense<0xFF800000> : vector<128xf32>
    %23 = vector.multi_reduction <maximumf>, %22, %cst_17 [1] : vector<128x8xf32> to vector<128xf32>
    %24 = vector.shape_cast %23 : vector<128xf32> to vector<128x1xf32>
    %25 = vector.broadcast %24 : vector<128x1xf32> to vector<128x8xf32>
    %26 = arith.subf %22, %25 : vector<128x8xf32>
    %27 = math.exp %26 : vector<128x8xf32>
    %cst_18 = arith.constant dense<0.000000e+00> : vector<128xf32>
    %28 = vector.multi_reduction <add>, %27, %cst_18 [1] : vector<128x8xf32> to vector<128xf32>
    %29 = vector.shape_cast %28 : vector<128xf32> to vector<128x1xf32>
    %30 = vector.broadcast %29 : vector<128x1xf32> to vector<128x8xf32>
    %31 = arith.divf %27, %30 : vector<128x8xf32>
    %c0_19 = arith.constant 0 : index
    %c0_20 = arith.constant 0 : index
    %32 = vector.load %arg8[%c0_19, %c0_20] : memref<128x8xf32, #tpu.memory_space<vmem>>, vector<128x8xf32>
    tpu.vector_store %arg8[%c0_19, %c0_20], %31 {strides = array<i32>} : memref<128x8xf32, #tpu.memory_space<vmem>>, vector<128x8xf32>,
    return
  }
  func.func @transform_0(%arg0: i32) -> (i32, i32) {
    %c0_i32 = arith.constant 0 : i32
    %c0_i32_0 = arith.constant 0 : i32
    return %arg0, %c0_i32 : i32, i32
  }
  func.func @transform_1(%arg0: i32) -> (i32, i32) {
    %c0_i32 = arith.constant 0 : i32
    %c0_i32_0 = arith.constant 0 : i32
    %c0_i32_1 = arith.constant 0 : i32
    return %c0_i32, %c0_i32_0 : i32, i32
  }
  func.func @transform_2(%arg0: i32) -> (i32, i32) {
    %c0_i32 = arith.constant 0 : i32
    %c0_i32_0 = arith.constant 0 : i32
    %c0_i32_1 = arith.constant 0 : i32
    return %c0_i32, %c0_i32_0 : i32, i32
  }
  func.func @transform_3(%arg0: i32) -> (i32, i32) {
    %c0_i32 = arith.constant 0 : i32
    %c0_i32_0 = arith.constant 0 : i32
    %c0_i32_1 = arith.constant 0 : i32
    return %c0_i32, %c0_i32_0 : i32, i32
  }
  func.func @transform_4(%arg0: i32) -> (i32, i32) {
    %c0_i32 = arith.constant 0 : i32
    %c0_i32_0 = arith.constant 0 : i32
    %c0_i32_1 = arith.constant 0 : i32
    return %c0_i32, %c0_i32_0 : i32, i32
  }
  func.func @transform_5(%arg0: i32) -> (i32, i32) {
    %c0_i32 = arith.constant 0 : i32
    %c0_i32_0 = arith.constant 0 : i32
    %c0_i32_1 = arith.constant 0 : i32
    return %c0_i32, %c0_i32_0 : i32, i32
  }
  func.func @transform_6(%arg0: i32) -> (i32, i32) {
    %c0_i32 = arith.constant 0 : i32
    %c0_i32_0 = arith.constant 0 : i32
    %c0_i32_1 = arith.constant 0 : i32
    return %c0_i32, %c0_i32_0 : i32, i32
  }
  func.func @transform_7(%arg0: i32) -> (i32, i32) {
    %c0_i32 = arith.constant 0 : i32
    %c0_i32_0 = arith.constant 0 : i32
    return %arg0, %c0_i32 : i32, i32
  }
}

</mosaic_0001>

<llo_original>
// kernel: flexnet_forward.1
$region0: #{flexnet_forward.1}
  #allocation0 [shape = 'u32[]', space=smem, size = 0x4, offset = 0x4, fixed_abs, tag = 'smem constant byte address 0x4 - core index']
  #allocation1 [shape = 'u32[72,128]{1,0:T(1,128)}', space=vmem, size = 0x9000, scoped, tag = 'internal scratch']
  %s0 = inlined_call_operand.vmem [shape: f32[384,16], index: 0, kind: input, shape index: {}]
  %s1 = inlined_call_operand.vmem [shape: bf16[16,32], index: 1, kind: input, shape index: {}]
  %s2 = inlined_call_operand.vmem [shape: f32[1,32], index: 2, kind: input, shape index: {}]
  %s3 = inlined_call_operand.vmem [shape: bf16[32,32], index: 3, kind: input, shape index: {}]
  %s4 = inlined_call_operand.vmem [shape: f32[1,32], index: 4, kind: input, shape index: {}]
  %s5 = inlined_call_operand.vmem [shape: bf16[32,8], index: 5, kind: input, shape index: {}]
  %s6 = inlined_call_operand.vmem [shape: f32[1,8], index: 6, kind: input, shape index: {}]
  %s7 = inlined_call_operand.vmem [shape: f32[384,8], index: 7, kind: output, shape index: {}]
  %s8 = sld [smem:[#allocation0]]
  $region61: #{flexnet_forward.1} parent=0
    _
  %s10 = ssub.s32 1, %s8
  %s11 = scalar_select 0, %s10, %s8
  loop: start=0, step=1, limit=5
  $region2: #{flexnet_forward.1} parent=0 // loop_pre_header
    _
  $region3: #{flexnet_forward.1} parent=0 // loop_header
    %s13 = sphi 0, %s17
    %p14 = scmp.ge.s32.totalorder %s13, 5
    %s23 = sphi 0, %s25
    %s26 = sphi 0, %s23
    %s27 = sphi 0, %s26
    %s43 = sphi 0, %s27
    %s47 = sphi 0, %s47
    %s49 = sphi 0, %s47
    %s50 = sphi 0, %s49
    %s64 = sphi 0, %s50
    %s68 = sphi 0, %s68
    %s70 = sphi 0, %s68
    %s71 = sphi 0, %s70
    %s85 = sphi 0, %s71
    %s89 = sphi 0, %s89
    %s91 = sphi 0, %s89
    %s92 = sphi 0, %s91
    %s106 = sphi 0, %s92
    %s110 = sphi 0, %s110
    %s112 = sphi 0, %s110
    %s113 = sphi 0, %s112
    %s127 = sphi 0, %s113
    %s131 = sphi 0, %s131
    %s133 = sphi 0, %s131
    %s134 = sphi 0, %s133
    %s148 = sphi 0, %s134
    %s152 = sphi 0, %s152
    %s154 = sphi 0, %s152
    %s155 = sphi 0, %s154
    %s169 = sphi 0, %s155
    %s175 = sphi 0, %s177
    %s178 = sphi 0, %s175
    %s179 = sphi 0, %s178
    %s195 = sphi 0, %s179
  $region4: #{flexnet_forward.1} parent=0 // loop_header_branch
    %16 = sbr.rel (%p14) target = $region8
  $region5: #{flexnet_forward.1} parent=0 // loop_body
    %s18 = ssub.s32 %s13, 1
    %s19 = ssub.s32 %s13, 2
    %s20 = sadd.s32 %s13, 1
    %s21 = ssub.s32 %s13, %s20
    %p22 = scmp.eq.s32.totalorder %s21, 0
    %s24 = sadd.s32 %s23, 1
    %s25 = scalar_select %p22, %s23, %s24
    %p28 = pneg %p22
    %p29 = scmp.eq.s32.totalorder %s13, 2
    %p30 = por %p28, %p29
    %p31 = scmp.ne.s32.totalorder %s23, %s26
    %p32 = scmp.eq.s32.totalorder %s13, 0
    %p33 = por %p31, %p32
    %p34 = scmp.ne.s32.totalorder %s23, %s26
    %p35 = scmp.eq.s32.totalorder %s18, 2
    %p36 = por %p34, %p35
    %p37 = scmp.ne.s32.totalorder %s26, %s27
    %p38 = scmp.eq.s32.totalorder %s18, 0
    %p39 = por %p37, %p38
    %p40 = scmp.ne.s32.totalorder %s26, %s27
    %p41 = scmp.eq.s32.totalorder %s19, 2
    %p42 = por %p40, %p41
    %p44 = scmp.ne.s32.totalorder %s27, %s43
    %p45 = scmp.eq.s32.totalorder %s19, 0
    %p46 = por %p44, %p45
    %s48 = sadd.s32 %s47, 1
    %p51 = scmp.eq.s32.totalorder %s13, 2
    %p52 = scmp.ne.s32.totalorder %s47, %s49
    %p53 = scmp.eq.s32.totalorder %s13, 0
    %p54 = por %p52, %p53
    %p55 = scmp.ne.s32.totalorder %s47, %s49
    %p56 = scmp.eq.s32.totalorder %s18, 2
    %p57 = por %p55, %p56
    %p58 = scmp.ne.s32.totalorder %s49, %s50
    %p59 = scmp.eq.s32.totalorder %s18, 0
    %p60 = por %p58, %p59
    %p61 = scmp.ne.s32.totalorder %s49, %s50
    %p62 = scmp.eq.s32.totalorder %s19, 2
    %p63 = por %p61, %p62
    %p65 = scmp.ne.s32.totalorder %s50, %s64
    %p66 = scmp.eq.s32.totalorder %s19, 0
    %p67 = por %p65, %p66
    %s69 = sadd.s32 %s68, 1
    %p72 = scmp.eq.s32.totalorder %s13, 2
    %p73 = scmp.ne.s32.totalorder %s68, %s70
    %p74 = scmp.eq.s32.totalorder %s13, 0
    %p75 = por %p73, %p74
    %p76 = scmp.ne.s32.totalorder %s68, %s70
    %p77 = scmp.eq.s32.totalorder %s18, 2
    %p78 = por %p76, %p77
    %p79 = scmp.ne.s32.totalorder %s70, %s71
    %p80 = scmp.eq.s32.totalorder %s18, 0
    %p81 = por %p79, %p80
    %p82 = scmp.ne.s32.totalorder %s70, %s71
    %p83 = scmp.eq.s32.totalorder %s19, 2
    %p84 = por %p82, %p83
    %p86 = scmp.ne.s32.totalorder %s71, %s85
    %p87 = scmp.eq.s32.totalorder %s19, 0
    %p88 = por %p86, %p87
    %s90 = sadd.s32 %s89, 1
    %p93 = scmp.eq.s32.totalorder %s13, 2
    %p94 = scmp.ne.s32.totalorder %s89, %s91
    %p95 = scmp.eq.s32.totalorder %s13, 0
    %p96 = por %p94, %p95
    %p97 = scmp.ne.s32.totalorder %s89, %s91
    %p98 = scmp.eq.s32.totalorder %s18, 2
    %p99 = por %p97, %p98
    %p100 = scmp.ne.s32.totalorder %s91, %s92
    %p101 = scmp.eq.s32.totalorder %s18, 0
    %p102 = por %p100, %p101
    %p103 = scmp.ne.s32.totalorder %s91, %s92
    %p104 = scmp.eq.s32.totalorder %s19, 2
    %p105 = por %p103, %p104
    %p107 = scmp.ne.s32.totalorder %s92, %s106
    %p108 = scmp.eq.s32.totalorder %s19, 0
    %p109 = por %p107, %p108
    %s111 = sadd.s32 %s110, 1
    %p114 = scmp.eq.s32.totalorder %s13, 2
    %p115 = scmp.ne.s32.totalorder %s110, %s112
    %p116 = scmp.eq.s32.totalorder %s13, 0
    %p117 = por %p115, %p116
    %p118 = scmp.ne.s32.totalorder %s110, %s112
    %p119 = scmp.eq.s32.totalorder %s18, 2
    %p120 = por %p118, %p119
    %p121 = scmp.ne.s32.totalorder %s112, %s113
    %p122 = scmp.eq.s32.totalorder %s18, 0
    %p123 = por %p121, %p122
    %p124 = scmp.ne.s32.totalorder %s112, %s113
    %p125 = scmp.eq.s32.totalorder %s19, 2
    %p126 = por %p124, %p125
    %p128 = scmp.ne.s32.totalorder %s113, %s127
    %p129 = scmp.eq.s32.totalorder %s19, 0
    %p130 = por %p128, %p129
    %s132 = sadd.s32 %s131, 1
    %p135 = scmp.eq.s32.totalorder %s13, 2
    %p136 = scmp.ne.s32.totalorder %s131, %s133
    %p137 = scmp.eq.s32.totalorder %s13, 0
    %p138 = por %p136, %p137
    %p139 = scmp.ne.s32.totalorder %s131, %s133
    %p140 = scmp.eq.s32.totalorder %s18, 2
    %p141 = por %p139, %p140
    %p142 = scmp.ne.s32.totalorder %s133, %s134
    %p143 = scmp.eq.s32.totalorder %s18, 0
    %p144 = por %p142, %p143
    %p145 = scmp.ne.s32.totalorder %s133, %s134
    %p146 = scmp.eq.s32.totalorder %s19, 2
    %p147 = por %p145, %p146
    %p149 = scmp.ne.s32.totalorder %s134, %s148
    %p150 = scmp.eq.s32.totalorder %s19, 0
    %p151 = por %p149, %p150
    %s153 = sadd.s32 %s152, 1
    %p156 = scmp.eq.s32.totalorder %s13, 2
    %p157 = scmp.ne.s32.totalorder %s152, %s154
    %p158 = scmp.eq.s32.totalorder %s13, 0
    %p159 = por %p157, %p158
    %p160 = scmp.ne.s32.totalorder %s152, %s154
    %p161 = scmp.eq.s32.totalorder %s18, 2
    %p162 = por %p160, %p161
    %p163 = scmp.ne.s32.totalorder %s154, %s155
    %p164 = scmp.eq.s32.totalorder %s18, 0
    %p165 = por %p163, %p164
    %p166 = scmp.ne.s32.totalorder %s154, %s155
    %p167 = scmp.eq.s32.totalorder %s19, 2
    %p168 = por %p166, %p167
    %p170 = scmp.ne.s32.totalorder %s155, %s169
    %p171 = scmp.eq.s32.totalorder %s19, 0
    %p172 = por %p170, %p171
    %s173 = ssub.s32 %s13, %s20
    %p174 = scmp.eq.s32.totalorder %s173, 0
    %s176 = sadd.s32 %s175, 1
    %s177 = scalar_select %p174, %s175, %s176
    %p180 = pneg %p174
    %p181 = scmp.eq.s32.totalorder %s13, 2
    %p182 = por %p180, %p181
    %p183 = scmp.ne.s32.totalorder %s175, %s178
    %p184 = scmp.eq.s32.totalorder %s13, 0
    %p185 = por %p183, %p184
    %p186 = scmp.ne.s32.totalorder %s175, %s178
    %p187 = scmp.eq.s32.totalorder %s18, 2
    %p188 = por %p186, %p187
    %p189 = scmp.ne.s32.totalorder %s178, %s179
    %p190 = scmp.eq.s32.totalorder %s18, 0
    %p191 = por %p189, %p190
    %p192 = scmp.ne.s32.totalorder %s178, %s179
    %p193 = scmp.eq.s32.totalorder %s19, 2
    %p194 = por %p192, %p193
    %p196 = scmp.ne.s32.totalorder %s179, %s195
    %p197 = scmp.eq.s32.totalorder %s19, 0
    %p198 = por %p196, %p197
    %p199 = scmp.le.s32.totalorder 1, %s13
    %p200 = scmp.lt.s32.totalorder %s13, 4
    %p201 = pnand %p199, %p200
    %p202 = pneg %p201
    // Predicated region
    $region9: #{flexnet_forward.1} parent=5 // pred_check
      _
    $region10: #{flexnet_forward.1} parent=5 // pred_check_branch
      %204 = sbr.rel (%p201) target = $region12
    $region11: #{flexnet_forward.1} parent=5 // pred_region
      %s205 = ssub.s32 %s13, 1
      // Predicated region
      $region13: #{flexnet_forward.1} parent=11 // pred_check
        %p206 = pneg %p60
      $region14: #{flexnet_forward.1} parent=11 // pred_check_branch
        %208 = sbr.rel (%p206) target = $region16
      $region15: #{flexnet_forward.1} parent=11 // pred_region
        _
      $region16: #{flexnet_forward.1} parent=11 // pred_fallthru
        _
      // Predicated region
      $region17: #{flexnet_forward.1} parent=11 // pred_check
        %p209 = pneg %p81
      $region18: #{flexnet_forward.1} parent=11 // pred_check_branch
        %211 = sbr.rel (%p209) target = $region20
      $region19: #{flexnet_forward.1} parent=11 // pred_region
        _
      $region20: #{flexnet_forward.1} parent=11 // pred_fallthru
        _
      // Predicated region
      $region21: #{flexnet_forward.1} parent=11 // pred_check
        %p212 = pneg %p102
      $region22: #{flexnet_forward.1} parent=11 // pred_check_branch
        %214 = sbr.rel (%p212) target = $region24
      $region23: #{flexnet_forward.1} parent=11 // pred_region
        _
      $region24: #{flexnet_forward.1} parent=11 // pred_fallthru
        _
      // Predicated region
      $region25: #{flexnet_forward.1} parent=11 // pred_check
        %p215 = pneg %p123
      $region26: #{flexnet_forward.1} parent=11 // pred_check_branch
        %217 = sbr.rel (%p215) target = $region28
      $region27: #{flexnet_forward.1} parent=11 // pred_region
        _
      $region28: #{flexnet_forward.1} parent=11 // pred_fallthru
        _
      // Predicated region
      $region29: #{flexnet_forward.1} parent=11 // pred_check
        %p218 = pneg %p144
      $region30: #{flexnet_forward.1} parent=11 // pred_check_branch
        %220 = sbr.rel (%p218) target = $region32
      $region31: #{flexnet_forward.1} parent=11 // pred_region
        _
      $region32: #{flexnet_forward.1} parent=11 // pred_fallthru
        _
      // Predicated region
      $region33: #{flexnet_forward.1} parent=11 // pred_check
        %p221 = pneg %p165
      $region34: #{flexnet_forward.1} parent=11 // pred_check_branch
        %223 = sbr.rel (%p221) target = $region36
      $region35: #{flexnet_forward.1} parent=11 // pred_region
        _
      $region36: #{flexnet_forward.1} parent=11 // pred_fallthru
        _
    $region12: #{flexnet_forward.1} parent=5 // pred_fallthru
      _
    %p224 = scmp.lt.s32.totalorder %s13, 3
    // Predicated region
    $region37: #{flexnet_forward.1} parent=5 // pred_check
      %p225 = pneg %p224
    $region38: #{flexnet_forward.1} parent=5 // pred_check_branch
      %227 = sbr.rel (%p225) target = $region40
    $region39: #{flexnet_forward.1} parent=5 // pred_region
      // Predicated region
      $region41: #{flexnet_forward.1} parent=39 // pred_check
        %p228 = pneg %p33
      $region42: #{flexnet_forward.1} parent=39 // pred_check_branch
        %230 = sbr.rel (%p228) target = $region44
      $region43: #{flexnet_forward.1} parent=39 // pred_region
        %s231 = smul.u32 16, %s13
        %p232 = scmp.lt.s32.totalorder %s231, 47
        %s233 = scalar_select %p232, %s231, 47
        %s234 = smul.addr %s233, 8
        %s235 = scalar_lea.vmem %s0, %s234
        %s236 = smul.u32 16, %s13
      $region44: #{flexnet_forward.1} parent=39 // pred_fallthru
        _
    $region40: #{flexnet_forward.1} parent=5 // pred_fallthru
      _
    %p237 = scmp.le.s32.totalorder 1, %s13
    %p238 = scmp.lt.s32.totalorder %s13, 4
    %p239 = pnand %p237, %p238
    %p240 = pneg %p239
    // Predicated region
    $region45: #{flexnet_forward.1} parent=5 // pred_check
      _
    $region46: #{flexnet_forward.1} parent=5 // pred_check_branch
      %242 = sbr.rel (%p239) target = $region48
    $region47: #{flexnet_forward.1} parent=5 // pred_region
      %s243 = ssub.s32 %s13, 1
      %s244 = smul.u32 16, %s18
      %p245 = scmp.lt.s32.totalorder %s244, 47
      %s246 = scalar_select %p245, %s244, 47
      %s247 = smul.addr %s246, 8
      %s248 = scalar_lea.vmem %s0, %s247
      %p249 = pneg %p39
      %p250 = pneg %p36
      %p251 = pneg %p60
      %p252 = pneg %p57
      %p253 = pneg %p81
      %p254 = pneg %p78
      %p255 = pneg %p102
      %p256 = pneg %p99
      %p257 = pneg %p123
      %p258 = pneg %p120
      %p259 = pneg %p144
      %p260 = pneg %p141
      %p261 = pneg %p165
      %p262 = pneg %p162
      %p263 = pneg %p191
      %p264 = pneg %p188
      %s265 = smul.u32 16, %s18
      %p266 = scmp.lt.s32.totalorder %s265, 47
      %s267 = scalar_select %p266, %s265, 47
      %s268 = smul.addr %s267, 8
      %s269 = scalar_lea.vmem %s7, %s268
      %s270 = smul.u32 16, %s18
      %p271 = scmp.lt.s32.totalorder %s270, 47
      %s272 = scalar_select %p271, %s270, 47
      %s273 = smul.addr %s272, 8
      %s274 = scalar_lea.vmem %s0, %s273
      %s275 = smul.u32 16, %s18
      %s276 = smul.u32 16, %s18
      %p277 = scmp.lt.s32.totalorder %s276, 47
      %s278 = scalar_select %p277, %s276, 47
      %s279 = smul.addr %s278, 8
      %s280 = scalar_lea.vmem %s7, %s279
      %s281 = smul.u32 16, %s18
      %v283 = vld [vmem:[%s274] sm:$0xff]
      %v284 = vld [vmem:[%s274 + $0x8] sm:$0xff]
      %v285 = vld [vmem:[%s274 + $0x10] sm:$0xff]
      %v286 = vld [vmem:[%s274 + $0x18] sm:$0xff]
      %v287 = vld [vmem:[%s274 + $0x20] sm:$0xff]
      %v288 = vld [vmem:[%s274 + $0x28] sm:$0xff]
      %v289 = vld [vmem:[%s274 + $0x30] sm:$0xff]
      %v290 = vld [vmem:[%s274 + $0x38] sm:$0xff]
      %v291 = vld [vmem:[%s274 + $0x40] sm:$0xff]
      %v292 = vld [vmem:[%s274 + $0x48] sm:$0xff]
      %v293 = vld [vmem:[%s274 + $0x50] sm:$0xff]
      %v294 = vld [vmem:[%s274 + $0x58] sm:$0xff]
      %v295 = vld [vmem:[%s274 + $0x60] sm:$0xff]
      %v296 = vld [vmem:[%s274 + $0x68] sm:$0xff]
      %v297 = vld [vmem:[%s274 + $0x70] sm:$0xff]
      %v298 = vld [vmem:[%s274 + $0x78] sm:$0xff]
      %v299 = vpack.c.bf16 %v284, %v283
      %v300 = vpack.c.bf16 %v286, %v285
      %v301 = vpack.c.bf16 %v288, %v287
      %v302 = vpack.c.bf16 %v290, %v289
      %v303 = vpack.c.bf16 %v292, %v291
      %v304 = vpack.c.bf16 %v294, %v293
      %v305 = vpack.c.bf16 %v296, %v295
      %v306 = vpack.c.bf16 %v298, %v297
      %v307 = vld [vmem:[%s1] sm:$0xf]
      %v308 = vld [vmem:[%s1 + $0x4] sm:$0xf]
      %v309 = vld [vmem:[%s2] sm:$0x1]
      %v311 = vperm.slane %v309, 0
      %v315 = vunpack.c.l.b16 %v307
      %v316 = vunpack.c.l.b16 %v308
      %v317 = vpack.c.b16 %v316, %v315
      %vm319 = vcmask 130048
      %v321 = vsel %vm319, %v299, 0
      %v324 = vsel %vm319, %v300, 0
      %v327 = vsel %vm319, %v301, 0
      %v330 = vsel %vm319, %v302, 0
      %v333 = vsel %vm319, %v303, 0
      %v336 = vsel %vm319, %v304, 0
      %v339 = vsel %vm319, %v305, 0
      %v342 = vsel %vm319, %v306, 0
      %344 = vmatpush.bf16.msra.mxu0 0
      %345 = vmatpush.bf16.msra.mxu0 0
      %346 = vmatpush.bf16.msra.mxu0 0
      %347 = vmatpush.bf16.msra.mxu0 0
      %348 = vmatpush.bf16.msra.mxu0 0
      %349 = vmatpush.bf16.msra.mxu0 0
      %350 = vmatpush.bf16.msra.mxu0 0
      %351 = vmatpush.bf16.msra.mxu0 %v317
      %352 = vmatmul.bf16.gmra.mxu0 %v321
      %v353 = vpop.f32.mrf.mxu0
      %v354 = vadd.f32 %v311, %v353
      %v355 = vpop.f32.mrf.mxu0
      %v356 = vadd.f32 %v311, %v355
      %357 = vmatmul.bf16.gmra.mxu0 %v324
      %v358 = vpop.f32.mrf.mxu0
      %v359 = vadd.f32 %v311, %v358
      %v360 = vpop.f32.mrf.mxu0
      %v361 = vadd.f32 %v311, %v360
      %362 = vmatmul.bf16.gmra.mxu0 %v327
      %v363 = vpop.f32.mrf.mxu0
      %v364 = vadd.f32 %v311, %v363
      %v365 = vpop.f32.mrf.mxu0
      %v366 = vadd.f32 %v311, %v365
      %367 = vmatmul.bf16.gmra.mxu0 %v330
      %v368 = vpop.f32.mrf.mxu0
      %v369 = vadd.f32 %v311, %v368
      %v370 = vpop.f32.mrf.mxu0
      %v371 = vadd.f32 %v311, %v370
      %372 = vmatmul.bf16.gmra.mxu0 %v333
      %v373 = vpop.f32.mrf.mxu0
      %v374 = vadd.f32 %v311, %v373
      %v375 = vpop.f32.mrf.mxu0
      %v376 = vadd.f32 %v311, %v375
      %377 = vmatmul.bf16.gmra.mxu0 %v336
      %v378 = vpop.f32.mrf.mxu0
      %v379 = vadd.f32 %v311, %v378
      %v380 = vpop.f32.mrf.mxu0
      %v381 = vadd.f32 %v311, %v380
      %382 = vmatmul.bf16.gmra.mxu0 %v339
      %v383 = vpop.f32.mrf.mxu0
      %v384 = vadd.f32 %v311, %v383
      %v385 = vpop.f32.mrf.mxu0
      %v386 = vadd.f32 %v311, %v385
      %387 = vmatmul.bf16.gmra.mxu0 %v342
      %v388 = vpop.f32.mrf.mxu0
      %v389 = vadd.f32 %v311, %v388
      %v390 = vpop.f32.mrf.mxu0
      %v391 = vadd.f32 %v311, %v390
      %392 = vdwg.mxu0
      %v393 = vmax.f32 %v354, 0.0
      %v394 = vmax.f32 %v356, 0.0
      %v395 = vmax.f32 %v359, 0.0
      %v396 = vmax.f32 %v361, 0.0
      %v397 = vmax.f32 %v364, 0.0
      %v398 = vmax.f32 %v366, 0.0
      %v399 = vmax.f32 %v369, 0.0
      %v400 = vmax.f32 %v371, 0.0
      %v401 = vmax.f32 %v374, 0.0
      %v402 = vmax.f32 %v376, 0.0
      %v403 = vmax.f32 %v379, 0.0
      %v404 = vmax.f32 %v381, 0.0
      %v405 = vmax.f32 %v384, 0.0
      %v406 = vmax.f32 %v386, 0.0
      %v407 = vmax.f32 %v389, 0.0
      %v408 = vmax.f32 %v391, 0.0
      %v409 = vpack.c.bf16 %v394, %v393
      %v410 = vpack.c.bf16 %v396, %v395
      %v411 = vpack.c.bf16 %v398, %v397
      %v412 = vpack.c.bf16 %v400, %v399
      %v413 = vpack.c.bf16 %v402, %v401
      %v414 = vpack.c.bf16 %v404, %v403
      %v415 = vpack.c.bf16 %v406, %v405
      %v416 = vpack.c.bf16 %v408, %v407
      %v417 = vld [vmem:[%s3] sm:$0xf]
      %v418 = vld [vmem:[%s3 + $0x4] sm:$0xf]
      %v419 = vld [vmem:[%s3 + $0x8] sm:$0xf]
      %v420 = vld [vmem:[%s3 + $0xc] sm:$0xf]
      %v421 = vld [vmem:[%s4] sm:$0x1]
      %v423 = vperm.slane %v421, 0
      %v429 = vunpack.c.l.b16 %v417
      %v430 = vunpack.c.l.b16 %v418
      %v431 = vunpack.c.l.b16 %v419
      %v432 = vunpack.c.l.b16 %v420
      %v433 = vpack.c.b16 %v430, %v429
      %v434 = vpack.c.b16 %v432, %v431
      %vm437 = vcmask 261120
      %v439 = vsel %vm437, %v409, 0
      %v442 = vsel %vm437, %v410, 0
      %v445 = vsel %vm437, %v411, 0
      %v448 = vsel %vm437, %v412, 0
      %v451 = vsel %vm437, %v413, 0
      %v454 = vsel %vm437, %v414, 0
      %v457 = vsel %vm437, %v415, 0
      %v460 = vsel %vm437, %v416, 0
      %462 = vmatpush.bf16.msra.mxu0 0
      %463 = vmatpush.bf16.msra.mxu0 0
      %464 = vmatpush.bf16.msra.mxu0 0
      %465 = vmatpush.bf16.msra.mxu0 0
      %466 = vmatpush.bf16.msra.mxu0 0
      %467 = vmatpush.bf16.msra.mxu0 0
      %468 = vmatpush.bf16.msra.mxu0 %v434
      %469 = vmatpush.bf16.msra.mxu0 %v433
      %470 = vmatmul.bf16.gmra.mxu0 %v439
      %v471 = vpop.f32.mrf.mxu0
      %v472 = vadd.f32 %v423, %v471
      %v473 = vpop.f32.mrf.mxu0
      %v474 = vadd.f32 %v423, %v473
      %475 = vmatmul.bf16.gmra.mxu0 %v442
      %v476 = vpop.f32.mrf.mxu0
      %v477 = vadd.f32 %v423, %v476
      %v478 = vpop.f32.mrf.mxu0
      %v479 = vadd.f32 %v423, %v478
      %480 = vmatmul.bf16.gmra.mxu0 %v445
      %v481 = vpop.f32.mrf.mxu0
      %v482 = vadd.f32 %v423, %v481
      %v483 = vpop.f32.mrf.mxu0
      %v484 = vadd.f32 %v423, %v483
      %485 = vmatmul.bf16.gmra.mxu0 %v448
      %v486 = vpop.f32.mrf.mxu0
      %v487 = vadd.f32 %v423, %v486
      %v488 = vpop.f32.mrf.mxu0
      %v489 = vadd.f32 %v423, %v488
      %490 = vmatmul.bf16.gmra.mxu0 %v451
      %v491 = vpop.f32.mrf.mxu0
      %v492 = vadd.f32 %v423, %v491
      %v493 = vpop.f32.mrf.mxu0
      %v494 = vadd.f32 %v423, %v493
      %495 = vmatmul.bf16.gmra.mxu0 %v454
      %v496 = vpop.f32.mrf.mxu0
      %v497 = vadd.f32 %v423, %v496
      %v498 = vpop.f32.mrf.mxu0
      %v499 = vadd.f32 %v423, %v498
      %500 = vmatmul.bf16.gmra.mxu0 %v457
      %v501 = vpop.f32.mrf.mxu0
      %v502 = vadd.f32 %v423, %v501
      %v503 = vpop.f32.mrf.mxu0
      %v504 = vadd.f32 %v423, %v503
      %505 = vmatmul.bf16.gmra.mxu0 %v460
      %v506 = vpop.f32.mrf.mxu0
      %v507 = vadd.f32 %v423, %v506
      %v508 = vpop.f32.mrf.mxu0
      %v509 = vadd.f32 %v423, %v508
      %510 = vdwg.mxu0
      %v511 = vmax.f32 %v472, 0.0
      %v512 = vmax.f32 %v474, 0.0
      %v513 = vmax.f32 %v477, 0.0
      %v514 = vmax.f32 %v479, 0.0
      %v515 = vmax.f32 %v482, 0.0
      %v516 = vmax.f32 %v484, 0.0
      %v517 = vmax.f32 %v487, 0.0
      %v518 = vmax.f32 %v489, 0.0
      %v519 = vmax.f32 %v492, 0.0
      %v520 = vmax.f32 %v494, 0.0
      %v521 = vmax.f32 %v497, 0.0
      %v522 = vmax.f32 %v499, 0.0
      %v523 = vmax.f32 %v502, 0.0
      %v524 = vmax.f32 %v504, 0.0
      %v525 = vmax.f32 %v507, 0.0
      %v526 = vmax.f32 %v509, 0.0
      %v527 = vpack.c.bf16 %v512, %v511
      %v528 = vpack.c.bf16 %v514, %v513
      %v529 = vpack.c.bf16 %v516, %v515
      %v530 = vpack.c.bf16 %v518, %v517
      %v531 = vpack.c.bf16 %v520, %v519
      %v532 = vpack.c.bf16 %v522, %v521
      %v533 = vpack.c.bf16 %v524, %v523
      %v534 = vpack.c.bf16 %v526, %v525
      %v535 = vld [vmem:[%s5] sm:$0xf]
      %v536 = vld [vmem:[%s5 + $0x4] sm:$0xf]
      %v537 = vld [vmem:[%s5 + $0x8] sm:$0xf]
      %v538 = vld [vmem:[%s5 + $0xc] sm:$0xf]
      %v539 = vld [vmem:[%s6] sm:$0x1]
      %v541 = vperm.slane %v539, 0
      %v547 = vunpack.c.l.b16 %v535
      %v548 = vunpack.c.l.b16 %v536
      %v549 = vunpack.c.l.b16 %v537
      %v550 = vunpack.c.l.b16 %v538
      %v551 = vpack.c.b16 %v548, %v547
      %v552 = vpack.c.b16 %v550, %v549
      %v556 = vsel %vm437, %v527, 0
      %v559 = vsel %vm437, %v528, 0
      %v562 = vsel %vm437, %v529, 0
      %v565 = vsel %vm437, %v530, 0
      %v568 = vsel %vm437, %v531, 0
      %v571 = vsel %vm437, %v532, 0
      %v574 = vsel %vm437, %v533, 0
      %v577 = vsel %vm437, %v534, 0
      %579 = vmatpush.bf16.msra.mxu0 0
      %580 = vmatpush.bf16.msra.mxu0 0
      %581 = vmatpush.bf16.msra.mxu0 0
      %582 = vmatpush.bf16.msra.mxu0 0
      %583 = vmatpush.bf16.msra.mxu0 0
      %584 = vmatpush.bf16.msra.mxu0 0
      %585 = vmatpush.bf16.msra.mxu0 %v552
      %586 = vmatpush.bf16.msra.mxu0 %v551
      %587 = vmatmul.bf16.gmra.mxu0 %v556
      %v588 = vpop.f32.mrf.mxu0
      %v589 = vadd.f32 %v541, %v588
      %v590 = vpop.f32.mrf.mxu0
      %v591 = vadd.f32 %v541, %v590
      %592 = vmatmul.bf16.gmra.mxu0 %v559
      %v593 = vpop.f32.mrf.mxu0
      %v594 = vadd.f32 %v541, %v593
      %v595 = vpop.f32.mrf.mxu0
      %v596 = vadd.f32 %v541, %v595
      %597 = vmatmul.bf16.gmra.mxu0 %v562
      %v598 = vpop.f32.mrf.mxu0
      %v599 = vadd.f32 %v541, %v598
      %v600 = vpop.f32.mrf.mxu0
      %v601 = vadd.f32 %v541, %v600
      %602 = vmatmul.bf16.gmra.mxu0 %v565
      %v603 = vpop.f32.mrf.mxu0
      %v604 = vadd.f32 %v541, %v603
      %v605 = vpop.f32.mrf.mxu0
      %v606 = vadd.f32 %v541, %v605
      %607 = vmatmul.bf16.gmra.mxu0 %v568
      %v608 = vpop.f32.mrf.mxu0
      %v609 = vadd.f32 %v541, %v608
      %v610 = vpop.f32.mrf.mxu0
      %v611 = vadd.f32 %v541, %v610
      %612 = vmatmul.bf16.gmra.mxu0 %v571
      %v613 = vpop.f32.mrf.mxu0
      %v614 = vadd.f32 %v541, %v613
      %v615 = vpop.f32.mrf.mxu0
      %v616 = vadd.f32 %v541, %v615
      %617 = vmatmul.bf16.gmra.mxu0 %v574
      %v618 = vpop.f32.mrf.mxu0
      %v619 = vadd.f32 %v541, %v618
      %v620 = vpop.f32.mrf.mxu0
      %v621 = vadd.f32 %v541, %v620
      %622 = vmatmul.bf16.gmra.mxu0 %v577
      %v623 = vpop.f32.mrf.mxu0
      %v624 = vadd.f32 %v541, %v623
      %v625 = vpop.f32.mrf.mxu0
      %v626 = vadd.f32 %v541, %v625
      %627 = vdwg.mxu0
      %vm628 = vcmask 64512
      %v629 = vsel %vm628, %v589, -inf
      %630 = vmax.xlane.f32.xlu0 %v629
      %v631 = vpop.xlane.xlu0 %630
      %v632 = vsel %vm628, %v591, -inf
      %633 = vmax.xlane.f32.xlu0 %v632
      %v634 = vpop.xlane.xlu0 %633
      %v635 = vsel %vm628, %v594, -inf
      %636 = vmax.xlane.f32.xlu0 %v635
      %v637 = vpop.xlane.xlu0 %636
      %v638 = vsel %vm628, %v596, -inf
      %639 = vmax.xlane.f32.xlu0 %v638
      %v640 = vpop.xlane.xlu0 %639
      %v641 = vsel %vm628, %v599, -inf
      %642 = vmax.xlane.f32.xlu0 %v641
      %v643 = vpop.xlane.xlu0 %642
      %v644 = vsel %vm628, %v601, -inf
      %645 = vmax.xlane.f32.xlu0 %v644
      %v646 = vpop.xlane.xlu0 %645
      %v647 = vsel %vm628, %v604, -inf
      %648 = vmax.xlane.f32.xlu0 %v647
      %v649 = vpop.xlane.xlu0 %648
      %v650 = vsel %vm628, %v606, -inf
      %651 = vmax.xlane.f32.xlu0 %v650
      %v652 = vpop.xlane.xlu0 %651
      %v653 = vsel %vm628, %v609, -inf
      %654 = vmax.xlane.f32.xlu0 %v653
      %v655 = vpop.xlane.xlu0 %654
      %v656 = vsel %vm628, %v611, -inf
      %657 = vmax.xlane.f32.xlu0 %v656
      %v658 = vpop.xlane.xlu0 %657
      %v659 = vsel %vm628, %v614, -inf
      %660 = vmax.xlane.f32.xlu0 %v659
      %v661 = vpop.xlane.xlu0 %660
      %v662 = vsel %vm628, %v616, -inf
      %663 = vmax.xlane.f32.xlu0 %v662
      %v664 = vpop.xlane.xlu0 %663
      %v665 = vsel %vm628, %v619, -inf
      %666 = vmax.xlane.f32.xlu0 %v665
      %v667 = vpop.xlane.xlu0 %666
      %v668 = vsel %vm628, %v621, -inf
      %669 = vmax.xlane.f32.xlu0 %v668
      %v670 = vpop.xlane.xlu0 %669
      %v671 = vsel %vm628, %v624, -inf
      %672 = vmax.xlane.f32.xlu0 %v671
      %v673 = vpop.xlane.xlu0 %672
      %v674 = vsel %vm628, %v626, -inf
      %675 = vmax.xlane.f32.xlu0 %v674
      %v676 = vpop.xlane.xlu0 %675
      %v677 = vsub.f32 %v589, %v631
      %v678 = vsub.f32 %v591, %v634
      %v679 = vsub.f32 %v594, %v637
      %v680 = vsub.f32 %v596, %v640
      %v681 = vsub.f32 %v599, %v643
      %v682 = vsub.f32 %v601, %v646
      %v683 = vsub.f32 %v604, %v649
      %v684 = vsub.f32 %v606, %v652
      %v685 = vsub.f32 %v609, %v655
      %v686 = vsub.f32 %v611, %v658
      %v687 = vsub.f32 %v614, %v661
      %v688 = vsub.f32 %v616, %v664
      %v689 = vsub.f32 %v619, %v667
      %v690 = vsub.f32 %v621, %v670
      %v691 = vsub.f32 %v624, %v673
      %v692 = vsub.f32 %v626, %v676
      %v693 = vmul.f32 %v677, 1.442695
      %v694 = vpow.pop %v693
      %v695 = vmul.f32 %v678, 1.442695
      %v696 = vpow.pop %v695
      %v697 = vmul.f32 %v679, 1.442695
      %v698 = vpow.pop %v697
      %v699 = vmul.f32 %v680, 1.442695
      %v700 = vpow.pop %v699
      %v701 = vmul.f32 %v681, 1.442695
      %v702 = vpow.pop %v701
      %v703 = vmul.f32 %v682, 1.442695
      %v704 = vpow.pop %v703
      %v705 = vmul.f32 %v683, 1.442695
      %v706 = vpow.pop %v705
      %v707 = vmul.f32 %v684, 1.442695
      %v708 = vpow.pop %v707
      %v709 = vmul.f32 %v685, 1.442695
      %v710 = vpow.pop %v709
      %v711 = vmul.f32 %v686, 1.442695
      %v712 = vpow.pop %v711
      %v713 = vmul.f32 %v687, 1.442695
      %v714 = vpow.pop %v713
      %v715 = vmul.f32 %v688, 1.442695
      %v716 = vpow.pop %v715
      %v717 = vmul.f32 %v689, 1.442695
      %v718 = vpow.pop %v717
      %v719 = vmul.f32 %v690, 1.442695
      %v720 = vpow.pop %v719
      %v721 = vmul.f32 %v691, 1.442695
      %v722 = vpow.pop %v721
      %v723 = vmul.f32 %v692, 1.442695
      %v724 = vpow.pop %v723
      %v725 = vsel %vm628, %v694, 0.0
      %726 = vadd.xlane.f32.xlu0 %v725
      %v727 = vpop.xlane.xlu0 %726
      %v728 = vsel %vm628, %v696, 0.0
      %729 = vadd.xlane.f32.xlu0 %v728
      %v730 = vpop.xlane.xlu0 %729
      %v731 = vsel %vm628, %v698, 0.0
      %732 = vadd.xlane.f32.xlu0 %v731
      %v733 = vpop.xlane.xlu0 %732
      %v734 = vsel %vm628, %v700, 0.0
      %735 = vadd.xlane.f32.xlu0 %v734
      %v736 = vpop.xlane.xlu0 %735
      %v737 = vsel %vm628, %v702, 0.0
      %738 = vadd.xlane.f32.xlu0 %v737
      %v739 = vpop.xlane.xlu0 %738
      %v740 = vsel %vm628, %v704, 0.0
      %741 = vadd.xlane.f32.xlu0 %v740
      %v742 = vpop.xlane.xlu0 %741
      %v743 = vsel %vm628, %v706, 0.0
      %744 = vadd.xlane.f32.xlu0 %v743
      %v745 = vpop.xlane.xlu0 %744
      %v746 = vsel %vm628, %v708, 0.0
      %747 = vadd.xlane.f32.xlu0 %v746
      %v748 = vpop.xlane.xlu0 %747
      %v749 = vsel %vm628, %v710, 0.0
      %750 = vadd.xlane.f32.xlu0 %v749
      %v751 = vpop.xlane.xlu0 %750
      %v752 = vsel %vm628, %v712, 0.0
      %753 = vadd.xlane.f32.xlu0 %v752
      %v754 = vpop.xlane.xlu0 %753
      %v755 = vsel %vm628, %v714, 0.0
      %756 = vadd.xlane.f32.xlu0 %v755
      %v757 = vpop.xlane.xlu0 %756
      %v758 = vsel %vm628, %v716, 0.0
      %759 = vadd.xlane.f32.xlu0 %v758
      %v760 = vpop.xlane.xlu0 %759
      %v761 = vsel %vm628, %v718, 0.0
      %762 = vadd.xlane.f32.xlu0 %v761
      %v763 = vpop.xlane.xlu0 %762
      %v764 = vsel %vm628, %v720, 0.0
      %765 = vadd.xlane.f32.xlu0 %v764
      %v766 = vpop.xlane.xlu0 %765
      %v767 = vsel %vm628, %v722, 0.0
      %768 = vadd.xlane.f32.xlu0 %v767
      %v769 = vpop.xlane.xlu0 %768
      %v770 = vsel %vm628, %v724, 0.0
      %771 = vadd.xlane.f32.xlu0 %v770
      %v772 = vpop.xlane.xlu0 %771
      %v773 = vrcp.pop %v727
      %v774 = vmul.f32 %v727, %v773
      %v775 = vsub.f32 1.0, %v774
      %v776 = vmul.f32 %v773, %v775
      %v777 = vadd.f32 %v773, %v776
      %vm778 = vweird.f32 %v727
      %vm779 = vweird.f32 %v773
      %vm780 = vmor %vm778, %vm779
      %v781 = vsel %vm780, %v773, %v777
      %v782 = vand.u32 2147483647, %v727
      %vm783 = vcmp.eq.f32.partialorder %v782, 8.507059e+37
      %v784 = vand.u32 %v727, 2147483648
      %v785 = vor.u32 1.1754944e-38, %v784
      %v786 = vsel %vm783, %v785, %v781
      %v787 = vmul.f32 %v694, %v786
      %v788 = vrcp.pop %v730
      %v789 = vmul.f32 %v730, %v788
      %v790 = vsub.f32 1.0, %v789
      %v791 = vmul.f32 %v788, %v790
      %v792 = vadd.f32 %v788, %v791
      %vm793 = vweird.f32 %v730
      %vm794 = vweird.f32 %v788
      %vm795 = vmor %vm793, %vm794
      %v796 = vsel %vm795, %v788, %v792
      %v797 = vand.u32 2147483647, %v730
      %vm798 = vcmp.eq.f32.partialorder %v797, 8.507059e+37
      %v799 = vand.u32 %v730, 2147483648
      %v800 = vor.u32 1.1754944e-38, %v799
      %v801 = vsel %vm798, %v800, %v796
      %v802 = vmul.f32 %v696, %v801
      %v803 = vrcp.pop %v733
      %v804 = vmul.f32 %v733, %v803
      %v805 = vsub.f32 1.0, %v804
      %v806 = vmul.f32 %v803, %v805
      %v807 = vadd.f32 %v803, %v806
      %vm808 = vweird.f32 %v733
      %vm809 = vweird.f32 %v803
      %vm810 = vmor %vm808, %vm809
      %v811 = vsel %vm810, %v803, %v807
      %v812 = vand.u32 2147483647, %v733
      %vm813 = vcmp.eq.f32.partialorder %v812, 8.507059e+37
      %v814 = vand.u32 %v733, 2147483648
      %v815 = vor.u32 1.1754944e-38, %v814
      %v816 = vsel %vm813, %v815, %v811
      %v817 = vmul.f32 %v698, %v816
      %v818 = vrcp.pop %v736
      %v819 = vmul.f32 %v736, %v818
      %v820 = vsub.f32 1.0, %v819
      %v821 = vmul.f32 %v818, %v820
      %v822 = vadd.f32 %v818, %v821
      %vm823 = vweird.f32 %v736
      %vm824 = vweird.f32 %v818
      %vm825 = vmor %vm823, %vm824
      %v826 = vsel %vm825, %v818, %v822
      %v827 = vand.u32 2147483647, %v736
      %vm828 = vcmp.eq.f32.partialorder %v827, 8.507059e+37
      %v829 = vand.u32 %v736, 2147483648
      %v830 = vor.u32 1.1754944e-38, %v829
      %v831 = vsel %vm828, %v830, %v826
      %v832 = vmul.f32 %v700, %v831
      %v833 = vrcp.pop %v739
      %v834 = vmul.f32 %v739, %v833
      %v835 = vsub.f32 1.0, %v834
      %v836 = vmul.f32 %v833, %v835
      %v837 = vadd.f32 %v833, %v836
      %vm838 = vweird.f32 %v739
      %vm839 = vweird.f32 %v833
      %vm840 = vmor %vm838, %vm839
      %v841 = vsel %vm840, %v833, %v837
      %v842 = vand.u32 2147483647, %v739
      %vm843 = vcmp.eq.f32.partialorder %v842, 8.507059e+37
      %v844 = vand.u32 %v739, 2147483648
      %v845 = vor.u32 1.1754944e-38, %v844
      %v846 = vsel %vm843, %v845, %v841
      %v847 = vmul.f32 %v702, %v846
      %v848 = vrcp.pop %v742
      %v849 = vmul.f32 %v742, %v848
      %v850 = vsub.f32 1.0, %v849
      %v851 = vmul.f32 %v848, %v850
      %v852 = vadd.f32 %v848, %v851
      %vm853 = vweird.f32 %v742
      %vm854 = vweird.f32 %v848
      %vm855 = vmor %vm853, %vm854
      %v856 = vsel %vm855, %v848, %v852
      %v857 = vand.u32 2147483647, %v742
      %vm858 = vcmp.eq.f32.partialorder %v857, 8.507059e+37
      %v859 = vand.u32 %v742, 2147483648
      %v860 = vor.u32 1.1754944e-38, %v859
      %v861 = vsel %vm858, %v860, %v856
      %v862 = vmul.f32 %v704, %v861
      %v863 = vrcp.pop %v745
      %v864 = vmul.f32 %v745, %v863
      %v865 = vsub.f32 1.0, %v864
      %v866 = vmul.f32 %v863, %v865
      %v867 = vadd.f32 %v863, %v866
      %vm868 = vweird.f32 %v745
      %vm869 = vweird.f32 %v863
      %vm870 = vmor %vm868, %vm869
      %v871 = vsel %vm870, %v863, %v867
      %v872 = vand.u32 2147483647, %v745
      %vm873 = vcmp.eq.f32.partialorder %v872, 8.507059e+37
      %v874 = vand.u32 %v745, 2147483648
      %v875 = vor.u32 1.1754944e-38, %v874
      %v876 = vsel %vm873, %v875, %v871
      %v877 = vmul.f32 %v706, %v876
      %v878 = vrcp.pop %v748
      %v879 = vmul.f32 %v748, %v878
      %v880 = vsub.f32 1.0, %v879
      %v881 = vmul.f32 %v878, %v880
      %v882 = vadd.f32 %v878, %v881
      %vm883 = vweird.f32 %v748
      %vm884 = vweird.f32 %v878
      %vm885 = vmor %vm883, %vm884
      %v886 = vsel %vm885, %v878, %v882
      %v887 = vand.u32 2147483647, %v748
      %vm888 = vcmp.eq.f32.partialorder %v887, 8.507059e+37
      %v889 = vand.u32 %v748, 2147483648
      %v890 = vor.u32 1.1754944e-38, %v889
      %v891 = vsel %vm888, %v890, %v886
      %v892 = vmul.f32 %v708, %v891
      %v893 = vrcp.pop %v751
      %v894 = vmul.f32 %v751, %v893
      %v895 = vsub.f32 1.0, %v894
      %v896 = vmul.f32 %v893, %v895
      %v897 = vadd.f32 %v893, %v896
      %vm898 = vweird.f32 %v751
      %vm899 = vweird.f32 %v893
      %vm900 = vmor %vm898, %vm899
      %v901 = vsel %vm900, %v893, %v897
      %v902 = vand.u32 2147483647, %v751
      %vm903 = vcmp.eq.f32.partialorder %v902, 8.507059e+37
      %v904 = vand.u32 %v751, 2147483648
      %v905 = vor.u32 1.1754944e-38, %v904
      %v906 = vsel %vm903, %v905, %v901
      %v907 = vmul.f32 %v710, %v906
      %v908 = vrcp.pop %v754
      %v909 = vmul.f32 %v754, %v908
      %v910 = vsub.f32 1.0, %v909
      %v911 = vmul.f32 %v908, %v910
      %v912 = vadd.f32 %v908, %v911
      %vm913 = vweird.f32 %v754
      %vm914 = vweird.f32 %v908
      %vm915 = vmor %vm913, %vm914
      %v916 = vsel %vm915, %v908, %v912
      %v917 = vand.u32 2147483647, %v754
      %vm918 = vcmp.eq.f32.partialorder %v917, 8.507059e+37
      %v919 = vand.u32 %v754, 2147483648
      %v920 = vor.u32 1.1754944e-38, %v919
      %v921 = vsel %vm918, %v920, %v916
      %v922 = vmul.f32 %v712, %v921
      %v923 = vrcp.pop %v757
      %v924 = vmul.f32 %v757, %v923
      %v925 = vsub.f32 1.0, %v924
      %v926 = vmul.f32 %v923, %v925
      %v927 = vadd.f32 %v923, %v926
      %vm928 = vweird.f32 %v757
      %vm929 = vweird.f32 %v923
      %vm930 = vmor %vm928, %vm929
      %v931 = vsel %vm930, %v923, %v927
      %v932 = vand.u32 2147483647, %v757
      %vm933 = vcmp.eq.f32.partialorder %v932, 8.507059e+37
      %v934 = vand.u32 %v757, 2147483648
      %v935 = vor.u32 1.1754944e-38, %v934
      %v936 = vsel %vm933, %v935, %v931
      %v937 = vmul.f32 %v714, %v936
      %v938 = vrcp.pop %v760
      %v939 = vmul.f32 %v760, %v938
      %v940 = vsub.f32 1.0, %v939
      %v941 = vmul.f32 %v938, %v940
      %v942 = vadd.f32 %v938, %v941
      %vm943 = vweird.f32 %v760
      %vm944 = vweird.f32 %v938
      %vm945 = vmor %vm943, %vm944
      %v946 = vsel %vm945, %v938, %v942
      %v947 = vand.u32 2147483647, %v760
      %vm948 = vcmp.eq.f32.partialorder %v947, 8.507059e+37
      %v949 = vand.u32 %v760, 2147483648
      %v950 = vor.u32 1.1754944e-38, %v949
      %v951 = vsel %vm948, %v950, %v946
      %v952 = vmul.f32 %v716, %v951
      %v953 = vrcp.pop %v763
      %v954 = vmul.f32 %v763, %v953
      %v955 = vsub.f32 1.0, %v954
      %v956 = vmul.f32 %v953, %v955
      %v957 = vadd.f32 %v953, %v956
      %vm958 = vweird.f32 %v763
      %vm959 = vweird.f32 %v953
      %vm960 = vmor %vm958, %vm959
      %v961 = vsel %vm960, %v953, %v957
      %v962 = vand.u32 2147483647, %v763
      %vm963 = vcmp.eq.f32.partialorder %v962, 8.507059e+37
      %v964 = vand.u32 %v763, 2147483648
      %v965 = vor.u32 1.1754944e-38, %v964
      %v966 = vsel %vm963, %v965, %v961
      %v967 = vmul.f32 %v718, %v966
      %v968 = vrcp.pop %v766
      %v969 = vmul.f32 %v766, %v968
      %v970 = vsub.f32 1.0, %v969
      %v971 = vmul.f32 %v968, %v970
      %v972 = vadd.f32 %v968, %v971
      %vm973 = vweird.f32 %v766
      %vm974 = vweird.f32 %v968
      %vm975 = vmor %vm973, %vm974
      %v976 = vsel %vm975, %v968, %v972
      %v977 = vand.u32 2147483647, %v766
      %vm978 = vcmp.eq.f32.partialorder %v977, 8.507059e+37
      %v979 = vand.u32 %v766, 2147483648
      %v980 = vor.u32 1.1754944e-38, %v979
      %v981 = vsel %vm978, %v980, %v976
      %v982 = vmul.f32 %v720, %v981
      %v983 = vrcp.pop %v769
      %v984 = vmul.f32 %v769, %v983
      %v985 = vsub.f32 1.0, %v984
      %v986 = vmul.f32 %v983, %v985
      %v987 = vadd.f32 %v983, %v986
      %vm988 = vweird.f32 %v769
      %vm989 = vweird.f32 %v983
      %vm990 = vmor %vm988, %vm989
      %v991 = vsel %vm990, %v983, %v987
      %v992 = vand.u32 2147483647, %v769
      %vm993 = vcmp.eq.f32.partialorder %v992, 8.507059e+37
      %v994 = vand.u32 %v769, 2147483648
      %v995 = vor.u32 1.1754944e-38, %v994
      %v996 = vsel %vm993, %v995, %v991
      %v997 = vmul.f32 %v722, %v996
      %v998 = vrcp.pop %v772
      %v999 = vmul.f32 %v772, %v998
      %v1000 = vsub.f32 1.0, %v999
      %v1001 = vmul.f32 %v998, %v1000
      %v1002 = vadd.f32 %v998, %v1001
      %vm1003 = vweird.f32 %v772
      %vm1004 = vweird.f32 %v998
      %vm1005 = vmor %vm1003, %vm1004
      %v1006 = vsel %vm1005, %v998, %v1002
      %v1007 = vand.u32 2147483647, %v772
      %vm1008 = vcmp.eq.f32.partialorder %v1007, 8.507059e+37
      %v1009 = vand.u32 %v772, 2147483648
      %v1010 = vor.u32 1.1754944e-38, %v1009
      %v1011 = vsel %vm1008, %v1010, %v1006
      %v1012 = vmul.f32 %v724, %v1011
      %1013 = vst.msk [vmem:[%s280] sm:$0xff] %vm628, %v787
      %1014 = vst.msk [vmem:[%s280 + $0x8] sm:$0xff] %vm628, %v802
      %1015 = vst.msk [vmem:[%s280 + $0x10] sm:$0xff] %vm628, %v817
      %1016 = vst.msk [vmem:[%s280 + $0x18] sm:$0xff] %vm628, %v832
      %1017 = vst.msk [vmem:[%s280 + $0x20] sm:$0xff] %vm628, %v847
      %1018 = vst.msk [vmem:[%s280 + $0x28] sm:$0xff] %vm628, %v862
      %1019 = vst.msk [vmem:[%s280 + $0x30] sm:$0xff] %vm628, %v877
      %1020 = vst.msk [vmem:[%s280 + $0x38] sm:$0xff] %vm628, %v892
      %1021 = vst.msk [vmem:[%s280 + $0x40] sm:$0xff] %vm628, %v907
      %1022 = vst.msk [vmem:[%s280 + $0x48] sm:$0xff] %vm628, %v922
      %1023 = vst.msk [vmem:[%s280 + $0x50] sm:$0xff] %vm628, %v937
      %1024 = vst.msk [vmem:[%s280 + $0x58] sm:$0xff] %vm628, %v952
      %1025 = vst.msk [vmem:[%s280 + $0x60] sm:$0xff] %vm628, %v967
      %1026 = vst.msk [vmem:[%s280 + $0x68] sm:$0xff] %vm628, %v982
      %1027 = vst.msk [vmem:[%s280 + $0x70] sm:$0xff] %vm628, %v997
      %1028 = vst.msk [vmem:[%s280 + $0x78] sm:$0xff] %vm628, %v1012
      %s1029 = smul.u32 16, %s18
      %p1030 = scmp.lt.s32.totalorder %s1029, 47
      %s1031 = scalar_select %p1030, %s1029, 47
      %s1032 = smul.addr %s1031, 8
      %s1033 = scalar_lea.vmem %s7, %s1032
      // Predicated region
      $region49: #{flexnet_forward.1} parent=47 // pred_check
        %p1034 = pneg %p188
      $region50: #{flexnet_forward.1} parent=47 // pred_check_branch
        %1036 = sbr.rel (%p1034) target = $region52
      $region51: #{flexnet_forward.1} parent=47 // pred_region
        %s1037 = smul.u32 16, %s18
      $region52: #{flexnet_forward.1} parent=47 // pred_fallthru
        _
    $region48: #{flexnet_forward.1} parent=5 // pred_fallthru
      _
    %p1038 = scmp.le.s32.totalorder 2, %s13
    // Predicated region
    $region53: #{flexnet_forward.1} parent=5 // pred_check
      %p1039 = pneg %p1038
    $region54: #{flexnet_forward.1} parent=5 // pred_check_branch
      %1041 = sbr.rel (%p1039) target = $region56
    $region55: #{flexnet_forward.1} parent=5 // pred_region
      %s1042 = ssub.s32 %s13, 2
      // Predicated region
      $region57: #{flexnet_forward.1} parent=55 // pred_check
        %p1043 = pneg %p194
      $region58: #{flexnet_forward.1} parent=55 // pred_check_branch
        %1045 = sbr.rel (%p1043) target = $region60
      $region59: #{flexnet_forward.1} parent=55 // pred_region
        %s1046 = smul.u32 16, %s19
        %p1047 = scmp.lt.s32.totalorder %s1046, 47
        %s1048 = scalar_select %p1047, %s1046, 47
        %s1049 = smul.addr %s1048, 8
        %s1050 = scalar_lea.vmem %s7, %s1049
      $region60: #{flexnet_forward.1} parent=55 // pred_fallthru
        _
    $region56: #{flexnet_forward.1} parent=5 // pred_fallthru
      _
  $region6: #{flexnet_forward.1} parent=0 // loop_footer
    %s17 = sadd.s32 1, %s13
  $region7: #{flexnet_forward.1} parent=0 // loop_footer_branch
    %12 = sbr.rel target = $region3
  $region8: #{flexnet_forward.1} parent=0 // loop_exit
    _

</llo_original>
